<compile_context>
chip_gen: v7x
topology: tpu7x:2x2x1
jax: 0.10.0
libtpu: 0.0.40
codegen_flags: <defaults>
</compile_context>

<pallas_src>
import jax
import jax.numpy as jnp
from jax.experimental import pallas as pl
from jax.experimental.pallas import tpu as pltpu


def _round_up(x, m):
    return (x + m - 1) // m * m


def _conv_stats_kernel(p_ref, w_ref, y_ref, sum_ref, sq_ref, acc_ref):
    # p_ref: (tm, tk) bf16 patch tile; w_ref: (tk, C_pad) bf16 weight block.
    # y_ref: (tm, C_pad) bf16 conv output tile (written at k == last).
    # sum_ref / sq_ref: (8, C_pad) f32 per-half partial accumulators, resident
    #   across the m and k grid axes (their index_map depends on h only).
    # acc_ref: (tm, C_pad) f32 conv accumulator scratch (resident across k).
    m = pl.program_id(1)
    k = pl.program_id(2)

    @pl.when((m == 0) & (k == 0))
    def _():
        sum_ref[...] = jnp.zeros_like(sum_ref)
        sq_ref[...] = jnp.zeros_like(sq_ref)

    @pl.when(k == 0)
    def _():
        acc_ref[...] = jnp.zeros_like(acc_ref)

    acc_ref[...] += jnp.dot(p_ref[...], w_ref[...],
                            preferred_element_type=jnp.float32)

    @pl.when(k == pl.num_programs(2) - 1)
    def _():
        y = acc_ref[...]
        y_ref[...] = y.astype(y_ref.dtype)
        # Deferred cross-sublane reduction: keep an (8, C_pad) partial; the
        # final 8-row reduce happens once in the tiny JAX BN-math step.
        y3 = y.reshape(y.shape[0] // 8, 8, y.shape[1])
        sum_ref[...] += jnp.sum(y3, axis=0)
        sq_ref[...] += jnp.sum(y3 * y3, axis=0)


def _bn_relu_kernel(y_ref, scale_ref, shift_ref, o_ref):
    # Pure elementwise BN affine + ReLU over the stored conv output.
    y = y_ref[...].astype(jnp.float32)
    o_ref[...] = jnp.maximum(y * scale_ref[...] + shift_ref[...],
                             0.0).astype(o_ref.dtype)


def conv_block_forward(x, weight, gamma, beta, *, stride, padding,
                       eps=1e-5, tile_m=512):
    """x: (N, C_in, H, W) f32, weight: (C_out, C_in, kh, kw) f32 -> NCHW f32."""
    N, C_in, H, W = x.shape
    C_out, _, kh, kw = weight.shape
    s, p = stride, padding

    H_out = (H + 2 * p - kh) // s + 1
    W_out = (W + 2 * p - kw) // s + 1
    M = N * H_out * W_out
    K = C_in * kh * kw

    # Lane/MXU-friendly padded sizes (256-aligned where it helps the v6e/v7x
    # 256x256 MXU; 128 is already optimal for the v5e 128x128 MXU).
    C_pad = 128 if C_out <= 128 else _round_up(C_out, 256)
    K_pad = _round_up(K, 128)
    if K_pad > 1024:                 # bound the resident weight block (v7x VMEM)
        tk = 512
        K_pad = _round_up(K_pad, tk)
    else:
        tk = K_pad
    num_k = K_pad // tk

    # M tile: multiple of 256, default 512, shrunk to the problem size and to
    # a v7x-safe VMEM budget computed from the real double-buffered footprint.
    tm = min(tile_m, max(256, _round_up(-(-M // 2), 256)))
    VMEM_CAP = 48 << 20              # fits v7x's 64 MiB/TC; v5e/v6e have 128 MiB

    def _footprint(tm_):
        p1 = (2 * (tm_ * tk * 2 + tk * C_pad * 2 + tm_ * C_pad * 2
                   + 2 * 8 * C_pad * 4) + tm_ * C_pad * 4)
        p2 = 2 * (tm_ * C_pad * 2 + 2 * 8 * C_pad * 4 + tm_ * C_pad * 4)
        return max(p1, p2)

    while tm > 256 and _footprint(tm) + (2 << 20) > VMEM_CAP:
        tm //= 2
    vmem_limit = int(min(_footprint(tm) + (2 << 20), VMEM_CAP))

    M_pad = _round_up(M, 2 * tm)     # two halves for the v7x parallel stats split
    num_m2 = M_pad // (2 * tm)
    num_m = 2 * num_m2

    # ---- glue: im2col in plain JAX (bf16 *before* the kh*kw expansion) ----
    # TODO(synk): build the (tm, K) patch tile in-kernel from shifted windows
    #             of an NHWC-padded input (manual DMA / element-offset maps)
    #             to avoid materializing the kh*kw expansion in HBM at all;
    #             kept in XLA glue here for lowering robustness.
    x_pad = jnp.pad(x.astype(jnp.bfloat16), ((0, 0), (0, 0), (p, p), (p, p)))
    slices = []
    for i in range(kh):
        for j in range(kw):
            sl = x_pad[:, :, i: i + (H_out - 1) * s + 1: s,
                             j: j + (W_out - 1) * s + 1: s]   # (N, C_in, Ho, Wo)
            slices.append(sl)
    patches = jnp.stack(slices, axis=0)                 # (kh*kw, N, C_in, Ho, Wo)
    patches = jnp.transpose(patches, (1, 3, 4, 2, 0))   # (N, Ho, Wo, C_in, kh*kw)
    patches = patches.reshape(M, K)                     # K order: (C_in, kh, kw)
    patches = jnp.pad(patches, ((0, M_pad - M), (0, K_pad - K)))

    w_mat = weight.astype(jnp.float32).reshape(C_out, K).T          # (K, C_out)
    w_mat = jnp.pad(w_mat, ((0, K_pad - K), (0, C_pad - C_out))).astype(jnp.bfloat16)

    gamma_p = jnp.pad(gamma.astype(jnp.float32), (0, C_pad - C_out))
    beta_p = jnp.pad(beta.astype(jnp.float32), (0, C_pad - C_out))

    # ---- pass 1: conv (MXU, f32 acc) + per-channel sum / sum-of-squares ----
    y_flat, sum_acc, sq_acc = pl.pallas_call(
        _conv_stats_kernel,
        out_shape=(jax.ShapeDtypeStruct((M_pad, C_pad), jnp.bfloat16),
                   jax.ShapeDtypeStruct((2 * 8, C_pad), jnp.float32),
                   jax.ShapeDtypeStruct((2 * 8, C_pad), jnp.float32)),
        grid_spec=pltpu.PrefetchScalarGridSpec(
            num_scalar_prefetch=0,
            grid=(2, num_m2, num_k),
            in_specs=[
                pl.BlockSpec((tm, tk), lambda h, m, k: (h * num_m2 + m, k)),
                pl.BlockSpec((tk, C_pad), lambda h, m, k: (k, 0)),
            ],
            out_specs=[
                pl.BlockSpec((tm, C_pad), lambda h, m, k: (h * num_m2 + m, 0)),
                pl.BlockSpec((8, C_pad), lambda h, m, k: (h, 0)),
                pl.BlockSpec((8, C_pad), lambda h, m, k: (h, 0)),
            ],
            scratch_shapes=[pltpu.VMEM((tm, C_pad), jnp.float32)]),
        compiler_params=pltpu.CompilerParams(
            dimension_semantics=("parallel", "arbitrary", "arbitrary"),
            vmem_limit_bytes=vmem_limit),
    )(patches, w_mat)

    # ---- tiny per-channel BN math in plain JAX ----
    # Training-mode (biased) batch variance via single-pass E[y^2] - mean^2 in
    # f32; padded rows contribute zero to both sums, divide by the true M.
    # TODO(synk): running_mean / running_var (momentum) buffer updates are not
    #             produced; only the forward activation is computed.
    sum_c = jnp.sum(sum_acc, axis=0)
    sq_c = jnp.sum(sq_acc, axis=0)
    mean = sum_c / M
    var = jnp.maximum(sq_c / M - mean * mean, 0.0)
    inv_std = jax.lax.rsqrt(var + eps)
    scale = (gamma_p * inv_std).reshape(1, C_pad)
    shift = (beta_p - mean * gamma_p * inv_std).reshape(1, C_pad)

    # ---- pass 2: elementwise BN affine + ReLU over the stored y ----
    out_flat = pl.pallas_call(
        _bn_relu_kernel,
        out_shape=jax.ShapeDtypeStruct((M_pad, C_pad), jnp.float32),
        grid_spec=pltpu.PrefetchScalarGridSpec(
            num_scalar_prefetch=0,
            grid=(num_m,),
            in_specs=[
                pl.BlockSpec((tm, C_pad), lambda i: (i, 0)),
                pl.BlockSpec((1, C_pad), lambda i: (0, 0)),
                pl.BlockSpec((1, C_pad), lambda i: (0, 0)),
            ],
            out_specs=pl.BlockSpec((tm, C_pad), lambda i: (i, 0)),
        ),
        compiler_params=pltpu.CompilerParams(
            dimension_semantics=("parallel",),
            vmem_limit_bytes=vmem_limit),
    )(y_flat, scale, shift)

    # Slice valid region, back to NCHW f32 (module semantics).  Returning NHWC
    # / bf16 here would save another HBM round-trip if downstream allows.
    out = out_flat[:M, :C_out].reshape(N, H_out, W_out, C_out)
    return jnp.transpose(out, (0, 3, 1, 2))


if __name__ == "__main__":
    # Small deterministic example consistent with ConvBlock(in=4, out=8, k=3, s=1, p=1)
    key = jax.random.PRNGKey(0)
    k_x, k_w = jax.random.split(key)

    N, C_in, H, W = 2, 4, 16, 16
    C_out, kh, kw = 8, 3, 3
    stride, padding = 1, 1

    x = jax.random.normal(k_x, (N, C_in, H, W), dtype=jnp.float32)

    # kaiming_normal_(mode='fan_in', nonlinearity='relu'): std = sqrt(2 / fan_in)
    fan_in = C_in * kh * kw
    std = (2.0 / fan_in) ** 0.5
    weight = std * jax.random.normal(k_w, (C_out, C_in, kh, kw), dtype=jnp.float32)

    # BatchNorm2d default affine init: weight=1, bias=0
    gamma = jnp.ones((C_out,), dtype=jnp.float32)
    beta = jnp.zeros((C_out,), dtype=jnp.float32)

    out = conv_block_forward(x, weight, gamma, beta, stride=stride, padding=padding)
    jax.block_until_ready(out)
    assert out.shape == (N, C_out, H, W)

    # Reference check (f32 conv + training-mode BN + ReLU); loose tolerance
    # since the kernel uses bf16 MXU inputs and a bf16 y intermediate.
    ref_y = jax.lax.conv_general_dilated(
        x, weight, window_strides=(stride, stride),
        padding=[(padding, padding), (padding, padding)],
        dimension_numbers=("NCHW", "OIHW", "NCHW"))
    mean_r = jnp.mean(ref_y, axis=(0, 2, 3), keepdims=True)
    var_r = jnp.mean((ref_y - mean_r) ** 2, axis=(0, 2, 3), keepdims=True)
    ref = jnp.maximum(
        (ref_y - mean_r) * jax.lax.rsqrt(var_r + 1e-5)
        * gamma.reshape(1, -1, 1, 1) + beta.reshape(1, -1, 1, 1), 0.0)
    max_err = float(jnp.max(jnp.abs(out - ref)))
    assert max_err < 0.1, f"max abs err {max_err}"

    print("KERNEL_OK")
</pallas_src>

<mosaic_0001>
module attributes {stable_mosaic.version = 11 : i64} {
  func.func @_conv_stats_kernel(%arg0: i32, %arg1: i32, %arg2: i32, %arg3: memref<256x128xbf16, #tpu.memory_space<vmem>>, %arg4: memref<128x128xbf16, #tpu.memory_space<vmem>>, %arg5: memref<256x128xbf16, #tpu.memory_space<vmem>>, %arg6: memref<8x128xf32, #tpu.memory_space<vmem>>, %arg7: memref<8x128xf32, #tpu.memory_space<vmem>>, %arg8: memref<256x128xf32, #tpu.memory_space<vmem>>) attributes {dimension_semantics = [#tpu.dimension_semantics<parallel>, #tpu.dimension_semantics<arbitrary>, #tpu.dimension_semantics<arbitrary>], iteration_bounds = array<i64: 2, 1, 1>, scalar_prefetch = 0 : i64, scratch_operands = 1 : i64, tpu.core_type = #tpu.core_type<tc>, window_params = [{transform_indices = @transform_0, window_bounds = array<i64: 256, 128>}, {transform_indices = @transform_1, window_bounds = array<i64: 128, 128>}, {transform_indices = @transform_2, window_bounds = array<i64: 256, 128>}, {transform_indices = @transform_3, window_bounds = array<i64: 8, 128>}, {transform_indices = @transform_4, window_bounds = array<i64: 8, 128>}]} {
    %c0_i32 = arith.constant 0 : i32
    %0 = arith.cmpi eq, %arg1, %c0_i32 : i32
    %c0_i32_0 = arith.constant 0 : i32
    %1 = arith.cmpi eq, %arg2, %c0_i32_0 : i32
    %2 = arith.andi %0, %1 : i1
    %3 = arith.extui %2 : i1 to i32
    %c0_i32_1 = arith.constant 0 : i32
    %4 = arith.cmpi ne, %3, %c0_i32_1 : i32
    scf.if %4 {
      %cst_13 = arith.constant 0.000000e+00 : f32
      %17 = vector.broadcast %cst_13 : f32 to vector<8x128xf32>
      %c0_14 = arith.constant 0 : index
      %c0_15 = arith.constant 0 : index
      %18 = vector.load %arg6[%c0_14, %c0_15] : memref<8x128xf32, #tpu.memory_space<vmem>>, vector<8x128xf32>
      tpu.vector_store %arg6[%c0_14, %c0_15], %17 {strides = array<i32>} : memref<8x128xf32, #tpu.memory_space<vmem>>, vector<8x128xf32>,
      %cst_16 = arith.constant 0.000000e+00 : f32
      %19 = vector.broadcast %cst_16 : f32 to vector<8x128xf32>
      %c0_17 = arith.constant 0 : index
      %c0_18 = arith.constant 0 : index
      %20 = vector.load %arg7[%c0_17, %c0_18] : memref<8x128xf32, #tpu.memory_space<vmem>>, vector<8x128xf32>
      tpu.vector_store %arg7[%c0_17, %c0_18], %19 {strides = array<i32>} : memref<8x128xf32, #tpu.memory_space<vmem>>, vector<8x128xf32>,
    } else {
    }
    %c0_i32_2 = arith.constant 0 : i32
    %5 = arith.cmpi eq, %arg2, %c0_i32_2 : i32
    %6 = arith.extui %5 : i1 to i32
    %c0_i32_3 = arith.constant 0 : i32
    %7 = arith.cmpi ne, %6, %c0_i32_3 : i32
    scf.if %7 {
      %cst_13 = arith.constant 0.000000e+00 : f32
      %17 = vector.broadcast %cst_13 : f32 to vector<256x128xf32>
      %c0_14 = arith.constant 0 : index
      %c0_15 = arith.constant 0 : index
      %18 = vector.load %arg8[%c0_14, %c0_15] : memref<256x128xf32, #tpu.memory_space<vmem>>, vector<256x128xf32>
      tpu.vector_store %arg8[%c0_14, %c0_15], %17 {strides = array<i32>} : memref<256x128xf32, #tpu.memory_space<vmem>>, vector<256x128xf32>,
    } else {
    }
    %c0 = arith.constant 0 : index
    %c0_4 = arith.constant 0 : index
    %8 = vector.load %arg8[%c0, %c0_4] : memref<256x128xf32, #tpu.memory_space<vmem>>, vector<256x128xf32>
    %c0_5 = arith.constant 0 : index
    %c0_6 = arith.constant 0 : index
    %9 = vector.load %arg3[%c0_5, %c0_6] : memref<256x128xbf16, #tpu.memory_space<vmem>>, vector<256x128xbf16>
    %c0_7 = arith.constant 0 : index
    %c0_8 = arith.constant 0 : index
    %10 = vector.load %arg4[%c0_7, %c0_8] : memref<128x128xbf16, #tpu.memory_space<vmem>>, vector<128x128xbf16>
    %cst = arith.constant dense<0.000000e+00> : vector<256x128xf32>
    %11 = tpu.matmul %9, %10, %cst {dimension_numbers = #tpu.dot_dimension_numbers<[1], [0], [0], [1], [0, 0, 1, 1], [], []>} : vector<256x128xbf16>, vector<128x128xbf16>, vector<256x128xf32> -> vector<256x128xf32>
    %12 = arith.addf %8, %11 : vector<256x128xf32>
    %c0_9 = arith.constant 0 : index
    %c0_10 = arith.constant 0 : index
    %13 = vector.load %arg8[%c0_9, %c0_10] : memref<256x128xf32, #tpu.memory_space<vmem>>, vector<256x128xf32>
    tpu.vector_store %arg8[%c0_9, %c0_10], %12 {strides = array<i32>} : memref<256x128xf32, #tpu.memory_space<vmem>>, vector<256x128xf32>,
    %c0_i32_11 = arith.constant 0 : i32
    %14 = arith.cmpi eq, %arg2, %c0_i32_11 : i32
    %15 = arith.extui %14 : i1 to i32
    %c0_i32_12 = arith.constant 0 : i32
    %16 = arith.cmpi ne, %15, %c0_i32_12 : i32
    scf.if %16 {
      %c0_13 = arith.constant 0 : index
      %c0_14 = arith.constant 0 : index
      %17 = vector.load %arg8[%c0_13, %c0_14] : memref<256x128xf32, #tpu.memory_space<vmem>>, vector<256x128xf32>
      %18 = arith.truncf %17 : vector<256x128xf32> to vector<256x128xbf16>
      %c0_15 = arith.constant 0 : index
      %c0_16 = arith.constant 0 : index
      %19 = vector.load %arg5[%c0_15, %c0_16] : memref<256x128xbf16, #tpu.memory_space<vmem>>, vector<256x128xbf16>
      tpu.vector_store %arg5[%c0_15, %c0_16], %18 {strides = array<i32>} : memref<256x128xbf16, #tpu.memory_space<vmem>>, vector<256x128xbf16>,
      %20 = vector.shape_cast %17 : vector<256x128xf32> to vector<32x8x128xf32>
      %c0_17 = arith.constant 0 : index
      %c0_18 = arith.constant 0 : index
      %21 = vector.load %arg6[%c0_17, %c0_18] : memref<8x128xf32, #tpu.memory_space<vmem>>, vector<8x128xf32>
      %cst_19 = arith.constant dense<0.000000e+00> : vector<8x128xf32>
      %22 = vector.multi_reduction <add>, %20, %cst_19 [0] : vector<32x8x128xf32> to vector<8x128xf32>
      %23 = arith.addf %21, %22 : vector<8x128xf32>
      %c0_20 = arith.constant 0 : index
      %c0_21 = arith.constant 0 : index
      %24 = vector.load %arg6[%c0_20, %c0_21] : memref<8x128xf32, #tpu.memory_space<vmem>>, vector<8x128xf32>
      tpu.vector_store %arg6[%c0_20, %c0_21], %23 {strides = array<i32>} : memref<8x128xf32, #tpu.memory_space<vmem>>, vector<8x128xf32>,
      %c0_22 = arith.constant 0 : index
      %c0_23 = arith.constant 0 : index
      %25 = vector.load %arg7[%c0_22, %c0_23] : memref<8x128xf32, #tpu.memory_space<vmem>>, vector<8x128xf32>
      %26 = arith.mulf %20, %20 : vector<32x8x128xf32>
      %cst_24 = arith.constant dense<0.000000e+00> : vector<8x128xf32>
      %27 = vector.multi_reduction <add>, %26, %cst_24 [0] : vector<32x8x128xf32> to vector<8x128xf32>
      %28 = arith.addf %25, %27 : vector<8x128xf32>
      %c0_25 = arith.constant 0 : index
      %c0_26 = arith.constant 0 : index
      %29 = vector.load %arg7[%c0_25, %c0_26] : memref<8x128xf32, #tpu.memory_space<vmem>>, vector<8x128xf32>
      tpu.vector_store %arg7[%c0_25, %c0_26], %28 {strides = array<i32>} : memref<8x128xf32, #tpu.memory_space<vmem>>, vector<8x128xf32>,
    } else {
    }
    return
  }
  func.func @transform_0(%arg0: i32, %arg1: i32, %arg2: i32) -> (i32, i32) {
    %c1_i32 = arith.constant 1 : i32
    %0 = arith.muli %arg0, %c1_i32 : i32
    %1 = arith.addi %0, %arg1 : i32
    %c0_i32 = arith.constant 0 : i32
    return %1, %arg2 : i32, i32
  }
  func.func @transform_1(%arg0: i32, %arg1: i32, %arg2: i32) -> (i32, i32) {
    %c0_i32 = arith.constant 0 : i32
    %c0_i32_0 = arith.constant 0 : i32
    return %arg2, %c0_i32 : i32, i32
  }
  func.func @transform_2(%arg0: i32, %arg1: i32, %arg2: i32) -> (i32, i32) {
    %c1_i32 = arith.constant 1 : i32
    %0 = arith.muli %arg0, %c1_i32 : i32
    %1 = arith.addi %0, %arg1 : i32
    %c0_i32 = arith.constant 0 : i32
    %c0_i32_0 = arith.constant 0 : i32
    return %1, %c0_i32 : i32, i32
  }
  func.func @transform_3(%arg0: i32, %arg1: i32, %arg2: i32) -> (i32, i32) {
    %c0_i32 = arith.constant 0 : i32
    %c0_i32_0 = arith.constant 0 : i32
    return %arg0, %c0_i32 : i32, i32
  }
  func.func @transform_4(%arg0: i32, %arg1: i32, %arg2: i32) -> (i32, i32) {
    %c0_i32 = arith.constant 0 : i32
    %c0_i32_0 = arith.constant 0 : i32
    return %arg0, %c0_i32 : i32, i32
  }
}

</mosaic_0001>

<llo_original>
// kernel: tpu_custom_call.1
$region0: #{tpu_custom_call.1}
  #allocation0 [shape = 'u32[]', space=smem, size = 0x4, offset = 0x4, fixed_abs, tag = 'smem constant byte address 0x4 - core index']
  #allocation1 [shape = 'u32[144,128]{1,0:T(1,128)}', space=vmem, size = 0x12000, scoped, tag = 'internal scratch']
  #allocation2 [shape = 'f32[256,128]{1,0:T(8,128)}', space=vmem, size = 0x20000, scoped, tag = 'scratch operand']
  %s0 = inlined_call_operand.hbm [shape: bf16[512,128], index: 0, kind: input, shape index: {}]
  %s1 = inlined_call_operand.hbm [shape: bf16[128,128], index: 1, kind: input, shape index: {}]
  %s2 = inlined_call_operand.hbm [shape: bf16[512,128], index: 2, kind: output, shape index: {0}]
  %s3 = inlined_call_operand.hbm [shape: f32[16,128], index: 3, kind: output, shape index: {1}]
  %s4 = inlined_call_operand.hbm [shape: f32[16,128], index: 4, kind: output, shape index: {2}]
  %5 = xla_tuple %s2, %s3, %s4
  %s6 = sld [smem:[#allocation0]]
  $region77: #{tpu_custom_call.1} parent=0
    _
  %s8 = ssub.s32 1, %s6
  %s9 = scalar_select 0, %s8, %s6
  $region1: #{tpu_custom_call.1} parent=0
    #allocation3 [shape = 'u8[131072]{0}', space=vmem, size = 0x20000, scoped, tag = 'input window, operand 0']
    #allocation4 [shape = 's32[2]{0}', space=sflag, size = 0x8, scoped, tag = 'scoped memory for tpu_custom_call.1']
    #allocation5 [shape = 's32[2]{0}', space=sflag, size = 0x8, scoped, tag = 'scoped memory for tpu_custom_call.1']
    #allocation6 [shape = 'u8[32768]{0}', space=vmem, size = 0x8000, scoped, tag = 'input window, operand 1, single buffered']
    #allocation7 [shape = 's32[1]{0}', space=sflag, size = 0x4, scoped, tag = 'scoped memory for tpu_custom_call.1']
    #allocation8 [shape = 'u8[131072]{0}', space=vmem, size = 0x20000, scoped, tag = 'output window, operand 0']
    #allocation9 [shape = 'u8[8192]{0}', space=vmem, size = 0x2000, scoped, tag = 'output window, operand 1']
    #allocation10 [shape = 's32[2]{0}', space=sflag, size = 0x8, scoped, tag = 'scoped memory for tpu_custom_call.1']
    #allocation11 [shape = 'u8[8192]{0}', space=vmem, size = 0x2000, scoped, tag = 'output window, operand 2']
    %10 = vsyncpa [#allocation4], 0
    %s11 = scalar_lea.sflag [#allocation4], 1
    %12 = vsyncpa %s11, 0
    %13 = vsyncpa [#allocation7], 0
    %14 = vsyncpa [#allocation5], 0
    %s15 = scalar_lea.sflag [#allocation5], 1
    %16 = vsyncpa %s15, 0
    %17 = vsyncpa [#allocation10], 0
    %s18 = scalar_lea.sflag [#allocation10], 1
    %19 = vsyncpa %s18, 0
    loop: start=0, step=1, limit=4
    $region2: #{tpu_custom_call.1} parent=1 // loop_pre_header
      _
    $region3: #{tpu_custom_call.1} parent=1 // loop_header
      %s21 = sphi 0, %s25
      %p22 = scmp.ge.s32.totalorder %s21, 4
      %s28 = sphi 0, %s47
      %s29 = sphi 0, %s43
      %s30 = sphi 0, %s39
      %s31 = sphi 0, %s28
      %s32 = sphi 0, %s29
      %s33 = sphi 0, %s30
      %s34 = sphi 0, %s31
      %s35 = sphi 0, %s32
      %s36 = sphi 0, %s33
      %s54 = sphi 0, %s56
      %s57 = sphi 0, %s54
      %s58 = sphi 0, %s57
      %s74 = sphi 0, %s58
      %s80 = sphi 0, %s82
      %s83 = sphi 0, %s80
      %s84 = sphi 0, %s83
      %s100 = sphi 0, %s84
      %s108 = sphi 0, %s110
      %s111 = sphi 0, %s108
      %s112 = sphi 0, %s111
      %s128 = sphi 0, %s112
      %s134 = sphi 0, %s136
      %s137 = sphi 0, %s134
      %s138 = sphi 0, %s137
      %s154 = sphi 0, %s138
      %s160 = sphi 0, %s162
      %s163 = sphi 0, %s160
      %s164 = sphi 0, %s163
      %s180 = sphi 0, %s164
    $region4: #{tpu_custom_call.1} parent=1 // loop_header_branch
      %24 = sbr.rel (%p22) target = $region8
    $region5: #{tpu_custom_call.1} parent=1 // loop_body
      %s26 = ssub.s32 %s21, 1
      %s27 = ssub.s32 %s21, 2
      %s37 = sadd.s32 1, %s30
      %p38 = scmp.ge.s32.totalorder %s37, 1
      %s39 = scalar_select %p38, 0, %s37
      %s40 = sadd.s32 1, %s29
      %s41 = scalar_select %p38, %s40, %s29
      %p42 = scmp.ge.s32.totalorder %s41, 1
      %s43 = scalar_select %p42, 0, %s41
      %s44 = sadd.s32 1, %s28
      %s45 = scalar_select %p42, %s44, %s28
      %p46 = scmp.ge.s32.totalorder %s45, 2
      %s47 = scalar_select %p46, 0, %s45
      %s48 = sadd.s32 %s28, %s29
      %s49 = sadd.s32 %s47, %s43
      %s50 = ssub.s32 %s48, %s49
      %s51 = ssub.s32 %s30, %s39
      %s52 = sor.u32 %s50, %s51
      %p53 = scmp.eq.s32.totalorder %s52, 0
      %s55 = sadd.s32 %s54, 1
      %s56 = scalar_select %p53, %s54, %s55
      %p59 = pneg %p53
      %p60 = scmp.eq.s32.totalorder %s21, 1
      %p61 = por %p59, %p60
      %p62 = scmp.ne.s32.totalorder %s54, %s57
      %p63 = scmp.eq.s32.totalorder %s21, 0
      %p64 = por %p62, %p63
      %p65 = scmp.ne.s32.totalorder %s54, %s57
      %p66 = scmp.eq.s32.totalorder %s26, 1
      %p67 = por %p65, %p66
      %p68 = scmp.ne.s32.totalorder %s57, %s58
      %p69 = scmp.eq.s32.totalorder %s26, 0
      %p70 = por %p68, %p69
      %p71 = scmp.ne.s32.totalorder %s57, %s58
      %p72 = scmp.eq.s32.totalorder %s27, 1
      %p73 = por %p71, %p72
      %p75 = scmp.ne.s32.totalorder %s58, %s74
      %p76 = scmp.eq.s32.totalorder %s27, 0
      %p77 = por %p75, %p76
      %s78 = ssub.s32 %s30, %s39
      %p79 = scmp.eq.s32.totalorder %s78, 0
      %s81 = sadd.s32 %s80, 1
      %s82 = scalar_select %p79, %s80, %s81
      %p85 = pneg %p79
      %p86 = scmp.eq.s32.totalorder %s21, 1
      %p87 = por %p85, %p86
      %p88 = scmp.ne.s32.totalorder %s80, %s83
      %p89 = scmp.eq.s32.totalorder %s21, 0
      %p90 = por %p88, %p89
      %p91 = scmp.ne.s32.totalorder %s80, %s83
      %p92 = scmp.eq.s32.totalorder %s26, 1
      %p93 = por %p91, %p92
      %p94 = scmp.ne.s32.totalorder %s83, %s84
      %p95 = scmp.eq.s32.totalorder %s26, 0
      %p96 = por %p94, %p95
      %p97 = scmp.ne.s32.totalorder %s83, %s84
      %p98 = scmp.eq.s32.totalorder %s27, 1
      %p99 = por %p97, %p98
      %p101 = scmp.ne.s32.totalorder %s84, %s100
      %p102 = scmp.eq.s32.totalorder %s27, 0
      %p103 = por %p101, %p102
      %s104 = sadd.s32 %s28, %s29
      %s105 = sadd.s32 %s47, %s43
      %s106 = ssub.s32 %s104, %s105
      %p107 = scmp.eq.s32.totalorder %s106, 0
      %s109 = sadd.s32 %s108, 1
      %s110 = scalar_select %p107, %s108, %s109
      %p113 = pneg %p107
      %p114 = scmp.eq.s32.totalorder %s21, 1
      %p115 = por %p113, %p114
      %p116 = scmp.ne.s32.totalorder %s108, %s111
      %p117 = scmp.eq.s32.totalorder %s21, 0
      %p118 = por %p116, %p117
      %p119 = scmp.ne.s32.totalorder %s108, %s111
      %p120 = scmp.eq.s32.totalorder %s26, 1
      %p121 = por %p119, %p120
      %p122 = scmp.ne.s32.totalorder %s111, %s112
      %p123 = scmp.eq.s32.totalorder %s26, 0
      %p124 = por %p122, %p123
      %p125 = scmp.ne.s32.totalorder %s111, %s112
      %p126 = scmp.eq.s32.totalorder %s27, 1
      %p127 = por %p125, %p126
      %p129 = scmp.ne.s32.totalorder %s112, %s128
      %p130 = scmp.eq.s32.totalorder %s27, 0
      %p131 = por %p129, %p130
      %s132 = ssub.s32 %s28, %s47
      %p133 = scmp.eq.s32.totalorder %s132, 0
      %s135 = sadd.s32 %s134, 1
      %s136 = scalar_select %p133, %s134, %s135
      %p139 = pneg %p133
      %p140 = scmp.eq.s32.totalorder %s21, 1
      %p141 = por %p139, %p140
      %p142 = scmp.ne.s32.totalorder %s134, %s137
      %p143 = scmp.eq.s32.totalorder %s21, 0
      %p144 = por %p142, %p143
      %p145 = scmp.ne.s32.totalorder %s134, %s137
      %p146 = scmp.eq.s32.totalorder %s26, 1
      %p147 = por %p145, %p146
      %p148 = scmp.ne.s32.totalorder %s137, %s138
      %p149 = scmp.eq.s32.totalorder %s26, 0
      %p150 = por %p148, %p149
      %p151 = scmp.ne.s32.totalorder %s137, %s138
      %p152 = scmp.eq.s32.totalorder %s27, 1
      %p153 = por %p151, %p152
      %p155 = scmp.ne.s32.totalorder %s138, %s154
      %p156 = scmp.eq.s32.totalorder %s27, 0
      %p157 = por %p155, %p156
      %s158 = ssub.s32 %s28, %s47
      %p159 = scmp.eq.s32.totalorder %s158, 0
      %s161 = sadd.s32 %s160, 1
      %s162 = scalar_select %p159, %s160, %s161
      %p165 = pneg %p159
      %p166 = scmp.eq.s32.totalorder %s21, 1
      %p167 = por %p165, %p166
      %p168 = scmp.ne.s32.totalorder %s160, %s163
      %p169 = scmp.eq.s32.totalorder %s21, 0
      %p170 = por %p168, %p169
      %p171 = scmp.ne.s32.totalorder %s160, %s163
      %p172 = scmp.eq.s32.totalorder %s26, 1
      %p173 = por %p171, %p172
      %p174 = scmp.ne.s32.totalorder %s163, %s164
      %p175 = scmp.eq.s32.totalorder %s26, 0
      %p176 = por %p174, %p175
      %p177 = scmp.ne.s32.totalorder %s163, %s164
      %p178 = scmp.eq.s32.totalorder %s27, 1
      %p179 = por %p177, %p178
      %p181 = scmp.ne.s32.totalorder %s164, %s180
      %p182 = scmp.eq.s32.totalorder %s27, 0
      %p183 = por %p181, %p182
      %p184 = scmp.le.s32.totalorder 1, %s21
      %p185 = scmp.lt.s32.totalorder %s21, 3
      %p186 = pnand %p184, %p185
      %p187 = pneg %p186
      // Predicated region
      $region9: #{tpu_custom_call.1} parent=5 // pred_check
        _
      $region10: #{tpu_custom_call.1} parent=5 // pred_check_branch
        %189 = sbr.rel (%p186) target = $region12
      $region11: #{tpu_custom_call.1} parent=5 // pred_region
        %s190 = ssub.s32 %s21, 1
        // Predicated region
        $region13: #{tpu_custom_call.1} parent=11 // pred_check
          %p191 = pneg %p96
        $region14: #{tpu_custom_call.1} parent=11 // pred_check_branch
          %193 = sbr.rel (%p191) target = $region16
        $region15: #{tpu_custom_call.1} parent=11 // pred_region
          %s194 = smul.u32 16, %s33
          %s196 = ssub.s32 1024, 1024
          %197 = vsyncadd [#allocation7], %s196
          %s198 = smul.addr %s194, 64
          %s199 = scalar_lea.hbm %s1, %s198
          %s200 = sshll.u32 [#allocation6], 4
          %s201 = int_to_ptr.vmem [resolvable:$true] %s200
          %206 = dma.hbm_to_vmem [thread:$0]  %s199, 1024, %s201, [#allocation7], 64, 64, 4
        $region16: #{tpu_custom_call.1} parent=11 // pred_fallthru
          _
      $region12: #{tpu_custom_call.1} parent=5 // pred_fallthru
        _
      %p207 = scmp.lt.s32.totalorder %s21, 2
      // Predicated region
      $region17: #{tpu_custom_call.1} parent=5 // pred_check
        %p208 = pneg %p207
      $region18: #{tpu_custom_call.1} parent=5 // pred_check_branch
        %210 = sbr.rel (%p208) target = $region20
      $region19: #{tpu_custom_call.1} parent=5 // pred_region
        // Predicated region
        $region21: #{tpu_custom_call.1} parent=19 // pred_check
          %p211 = pneg %p64
        $region22: #{tpu_custom_call.1} parent=19 // pred_check_branch
          %213 = sbr.rel (%p211) target = $region24
        $region23: #{tpu_custom_call.1} parent=19 // pred_region
          %s214 = sand.u32 %s54, 1
          %s215 = scalar_lea.sflag [#allocation4], %s214
          %s216 = sand.u32 %s54, 1
          %s217 = smul.addr %s216, 128
          %s218 = scalar_lea.vmem [#allocation3], %s217
          %s219 = sadd.s32 %s28, %s29
          %s220 = smul.u32 32, %s219
          %s222 = ssub.s32 2048, 2048
          %223 = vsyncadd %s215, %s222
          %s224 = sadd.s32 %s30, %s220
          %s225 = smul.addr %s224, 64
          %s226 = scalar_lea.hbm %s0, %s225
          %s227 = sshll.u32 %s218, 4
          %s228 = int_to_ptr.vmem [resolvable:$true] %s227
          %233 = dma.hbm_to_vmem [thread:$0]  %s226, 2048, %s228, %s215, 64, 64, 4
        $region24: #{tpu_custom_call.1} parent=19 // pred_fallthru
          _
      $region20: #{tpu_custom_call.1} parent=5 // pred_fallthru
        _
      %p234 = scmp.le.s32.totalorder 1, %s21
      %p235 = scmp.lt.s32.totalorder %s21, 3
      %p236 = pnand %p234, %p235
      %p237 = pneg %p236
      // Predicated region
      $region25: #{tpu_custom_call.1} parent=5 // pred_check
        _
      $region26: #{tpu_custom_call.1} parent=5 // pred_check_branch
        %239 = sbr.rel (%p236) target = $region28
      $region27: #{tpu_custom_call.1} parent=5 // pred_region
        %s240 = ssub.s32 %s21, 1
        %s241 = sand.u32 %s57, 1
        %s242 = scalar_lea.sflag [#allocation4], %s241
        %s243 = sand.u32 %s57, 1
        %s244 = smul.addr %s243, 128
        %s245 = scalar_lea.vmem [#allocation3], %s244
        // Predicated region
        $region29: #{tpu_custom_call.1} parent=27 // pred_check
          %p246 = pneg %p70
        $region30: #{tpu_custom_call.1} parent=27 // pred_check_branch
          %248 = sbr.rel (%p246) target = $region32
        $region31: #{tpu_custom_call.1} parent=27 // pred_region
          %249 = dma.done %s242, 2048
        $region32: #{tpu_custom_call.1} parent=27 // pred_fallthru
          _
        // Predicated region
        $region33: #{tpu_custom_call.1} parent=27 // pred_check
          %p250 = pneg %p96
        $region34: #{tpu_custom_call.1} parent=27 // pred_check_branch
          %252 = sbr.rel (%p250) target = $region36
        $region35: #{tpu_custom_call.1} parent=27 // pred_region
          %253 = dma.done [#allocation7], 1024
        $region36: #{tpu_custom_call.1} parent=27 // pred_fallthru
          _
        %s254 = sand.u32 %s57, 1
        %s255 = scalar_lea.sflag [#allocation4], %s254
        %s256 = sand.u32 %s57, 1
        %s257 = smul.addr %s256, 128
        %s258 = scalar_lea.vmem [#allocation3], %s257
        %p259 = pneg %p70
        %p260 = pneg %p67
        %p261 = pneg %p96
        %p262 = pneg %p93
        %p263 = pneg %p124
        %p264 = pneg %p121
        %s265 = sand.u32 %s111, 1
        %s266 = scalar_lea.sflag [#allocation5], %s265
        %s267 = sand.u32 %s111, 1
        %s268 = smul.addr %s267, 128
        %s269 = scalar_lea.vmem [#allocation8], %s268
        %p270 = pneg %p150
        %p271 = pneg %p147
        %s272 = sand.u32 %s26, 1
        %s273 = scalar_lea.sflag [#allocation10], %s272
        %s274 = sand.u32 %s137, 1
        %s275 = smul.addr %s274, 8
        %s276 = scalar_lea.vmem [#allocation9], %s275
        %p277 = pneg %p176
        %p278 = pneg %p173
        %s279 = sand.u32 %s26, 1
        %s280 = scalar_lea.sflag [#allocation10], %s279
        %s281 = sand.u32 %s163, 1
        %s282 = smul.addr %s281, 8
        %s283 = scalar_lea.vmem [#allocation11], %s282
        %s284 = sadd.s32 %s31, %s32
        %s285 = smul.u32 32, %s284
        %s286 = smul.u32 16, %s33
        %s287 = sadd.s32 %s31, %s32
        %s288 = smul.u32 32, %s287
        %p290 = scmp.eq.s32.totalorder %s32, 0
        %p291 = scmp.eq.s32.totalorder %s33, 0
        %p292 = pnand %p290, %p291
        %p293 = pneg %p292
        // Predicated region
        $region37: #{tpu_custom_call.1} parent=27 // pred_check
          _
        $region38: #{tpu_custom_call.1} parent=27 // pred_check_branch
          %295 = sbr.rel (%p292) target = $region40
        $region39: #{tpu_custom_call.1} parent=27 // pred_region
          %296 = vst [vmem:[%s276] sm:$0xff] 0.0
          %297 = vst [vmem:[%s283] sm:$0xff] 0.0
        $region40: #{tpu_custom_call.1} parent=27 // pred_fallthru
          _
        // Predicated region
        $region41: #{tpu_custom_call.1} parent=27 // pred_check
          %p298 = pneg %p291
        $region42: #{tpu_custom_call.1} parent=27 // pred_check_branch
          %300 = sbr.rel (%p298) target = $region44
        $region43: #{tpu_custom_call.1} parent=27 // pred_region
          %301 = vst [vmem:[#allocation2] sm:$0xff] 0.0
          %302 = vst [vmem:[#allocation2 + $0x8] sm:$0xff] 0.0
          %303 = vst [vmem:[#allocation2 + $0x10] sm:$0xff] 0.0
          %304 = vst [vmem:[#allocation2 + $0x18] sm:$0xff] 0.0
          %305 = vst [vmem:[#allocation2 + $0x20] sm:$0xff] 0.0
          %306 = vst [vmem:[#allocation2 + $0x28] sm:$0xff] 0.0
          %307 = vst [vmem:[#allocation2 + $0x30] sm:$0xff] 0.0
          %308 = vst [vmem:[#allocation2 + $0x38] sm:$0xff] 0.0
          %309 = vst [vmem:[#allocation2 + $0x40] sm:$0xff] 0.0
          %310 = vst [vmem:[#allocation2 + $0x48] sm:$0xff] 0.0
          %311 = vst [vmem:[#allocation2 + $0x50] sm:$0xff] 0.0
          %312 = vst [vmem:[#allocation2 + $0x58] sm:$0xff] 0.0
          %313 = vst [vmem:[#allocation2 + $0x60] sm:$0xff] 0.0
          %314 = vst [vmem:[#allocation2 + $0x68] sm:$0xff] 0.0
          %315 = vst [vmem:[#allocation2 + $0x70] sm:$0xff] 0.0
          %316 = vst [vmem:[#allocation2 + $0x78] sm:$0xff] 0.0
          %317 = vst [vmem:[#allocation2 + $0x80] sm:$0xff] 0.0
          %318 = vst [vmem:[#allocation2 + $0x88] sm:$0xff] 0.0
          %319 = vst [vmem:[#allocation2 + $0x90] sm:$0xff] 0.0
          %320 = vst [vmem:[#allocation2 + $0x98] sm:$0xff] 0.0
          %321 = vst [vmem:[#allocation2 + $0xa0] sm:$0xff] 0.0
          %322 = vst [vmem:[#allocation2 + $0xa8] sm:$0xff] 0.0
          %323 = vst [vmem:[#allocation2 + $0xb0] sm:$0xff] 0.0
          %324 = vst [vmem:[#allocation2 + $0xb8] sm:$0xff] 0.0
          %325 = vst [vmem:[#allocation2 + $0xc0] sm:$0xff] 0.0
          %326 = vst [vmem:[#allocation2 + $0xc8] sm:$0xff] 0.0
          %327 = vst [vmem:[#allocation2 + $0xd0] sm:$0xff] 0.0
          %328 = vst [vmem:[#allocation2 + $0xd8] sm:$0xff] 0.0
          %329 = vst [vmem:[#allocation2 + $0xe0] sm:$0xff] 0.0
          %330 = vst [vmem:[#allocation2 + $0xe8] sm:$0xff] 0.0
          %331 = vst [vmem:[#allocation2 + $0xf0] sm:$0xff] 0.0
          %332 = vst [vmem:[#allocation2 + $0xf8] sm:$0xff] 0.0
        $region44: #{tpu_custom_call.1} parent=27 // pred_fallthru
          _
        %v333 = vld [vmem:[#allocation2] sm:$0xff]
        %v334 = vld [vmem:[#allocation2 + $0x8] sm:$0xff]
        %v335 = vld [vmem:[#allocation2 + $0x10] sm:$0xff]
        %v336 = vld [vmem:[#allocation2 + $0x18] sm:$0xff]
        %v337 = vld [vmem:[#allocation2 + $0x20] sm:$0xff]
        %v338 = vld [vmem:[#allocation2 + $0x28] sm:$0xff]
        %v339 = vld [vmem:[#allocation2 + $0x30] sm:$0xff]
        %v340 = vld [vmem:[#allocation2 + $0x38] sm:$0xff]
        %v341 = vld [vmem:[#allocation2 + $0x40] sm:$0xff]
        %v342 = vld [vmem:[#allocation2 + $0x48] sm:$0xff]
        %v343 = vld [vmem:[#allocation2 + $0x50] sm:$0xff]
        %v344 = vld [vmem:[#allocation2 + $0x58] sm:$0xff]
        %v345 = vld [vmem:[#allocation2 + $0x60] sm:$0xff]
        %v346 = vld [vmem:[#allocation2 + $0x68] sm:$0xff]
        %v347 = vld [vmem:[#allocation2 + $0x70] sm:$0xff]
        %v348 = vld [vmem:[#allocation2 + $0x78] sm:$0xff]
        %v349 = vld [vmem:[#allocation2 + $0x80] sm:$0xff]
        %v350 = vld [vmem:[#allocation2 + $0x88] sm:$0xff]
        %v351 = vld [vmem:[#allocation2 + $0x90] sm:$0xff]
        %v352 = vld [vmem:[#allocation2 + $0x98] sm:$0xff]
        %v353 = vld [vmem:[#allocation2 + $0xa0] sm:$0xff]
        %v354 = vld [vmem:[#allocation2 + $0xa8] sm:$0xff]
        %v355 = vld [vmem:[#allocation2 + $0xb0] sm:$0xff]
        %v356 = vld [vmem:[#allocation2 + $0xb8] sm:$0xff]
        %v357 = vld [vmem:[#allocation2 + $0xc0] sm:$0xff]
        %v358 = vld [vmem:[#allocation2 + $0xc8] sm:$0xff]
        %v359 = vld [vmem:[#allocation2 + $0xd0] sm:$0xff]
        %v360 = vld [vmem:[#allocation2 + $0xd8] sm:$0xff]
        %v361 = vld [vmem:[#allocation2 + $0xe0] sm:$0xff]
        %v362 = vld [vmem:[#allocation2 + $0xe8] sm:$0xff]
        %v363 = vld [vmem:[#allocation2 + $0xf0] sm:$0xff]
        %v364 = vld [vmem:[#allocation2 + $0xf8] sm:$0xff]
        %v365 = vld [vmem:[%s245] sm:$0xf]
        %v366 = vld [vmem:[%s245 + $0x4] sm:$0xf]
        %v367 = vld [vmem:[%s245 + $0x8] sm:$0xf]
        %v368 = vld [vmem:[%s245 + $0xc] sm:$0xf]
        %v369 = vld [vmem:[%s245 + $0x10] sm:$0xf]
        %v370 = vld [vmem:[%s245 + $0x14] sm:$0xf]
        %v371 = vld [vmem:[%s245 + $0x18] sm:$0xf]
        %v372 = vld [vmem:[%s245 + $0x1c] sm:$0xf]
        %v373 = vld [vmem:[%s245 + $0x20] sm:$0xf]
        %v374 = vld [vmem:[%s245 + $0x24] sm:$0xf]
        %v375 = vld [vmem:[%s245 + $0x28] sm:$0xf]
        %v376 = vld [vmem:[%s245 + $0x2c] sm:$0xf]
        %v377 = vld [vmem:[%s245 + $0x30] sm:$0xf]
        %v378 = vld [vmem:[%s245 + $0x34] sm:$0xf]
        %v379 = vld [vmem:[%s245 + $0x38] sm:$0xf]
        %v380 = vld [vmem:[%s245 + $0x3c] sm:$0xf]
        %v381 = vld [vmem:[%s245 + $0x40] sm:$0xf]
        %v382 = vld [vmem:[%s245 + $0x44] sm:$0xf]
        %v383 = vld [vmem:[%s245 + $0x48] sm:$0xf]
        %v384 = vld [vmem:[%s245 + $0x4c] sm:$0xf]
        %v385 = vld [vmem:[%s245 + $0x50] sm:$0xf]
        %v386 = vld [vmem:[%s245 + $0x54] sm:$0xf]
        %v387 = vld [vmem:[%s245 + $0x58] sm:$0xf]
        %v388 = vld [vmem:[%s245 + $0x5c] sm:$0xf]
        %v389 = vld [vmem:[%s245 + $0x60] sm:$0xf]
        %v390 = vld [vmem:[%s245 + $0x64] sm:$0xf]
        %v391 = vld [vmem:[%s245 + $0x68] sm:$0xf]
        %v392 = vld [vmem:[%s245 + $0x6c] sm:$0xf]
        %v393 = vld [vmem:[%s245 + $0x70] sm:$0xf]
        %v394 = vld [vmem:[%s245 + $0x74] sm:$0xf]
        %v395 = vld [vmem:[%s245 + $0x78] sm:$0xf]
        %v396 = vld [vmem:[%s245 + $0x7c] sm:$0xf]
        %v397 = vld [vmem:[#allocation6] sm:$0xf]
        %v398 = vld [vmem:[#allocation6 + $0x4] sm:$0xf]
        %v399 = vld [vmem:[#allocation6 + $0x8] sm:$0xf]
        %v400 = vld [vmem:[#allocation6 + $0xc] sm:$0xf]
        %v401 = vld [vmem:[#allocation6 + $0x10] sm:$0xf]
        %v402 = vld [vmem:[#allocation6 + $0x14] sm:$0xf]
        %v403 = vld [vmem:[#allocation6 + $0x18] sm:$0xf]
        %v404 = vld [vmem:[#allocation6 + $0x1c] sm:$0xf]
        %v405 = vld [vmem:[#allocation6 + $0x20] sm:$0xf]
        %v406 = vld [vmem:[#allocation6 + $0x24] sm:$0xf]
        %v407 = vld [vmem:[#allocation6 + $0x28] sm:$0xf]
        %v408 = vld [vmem:[#allocation6 + $0x2c] sm:$0xf]
        %v409 = vld [vmem:[#allocation6 + $0x30] sm:$0xf]
        %v410 = vld [vmem:[#allocation6 + $0x34] sm:$0xf]
        %v411 = vld [vmem:[#allocation6 + $0x38] sm:$0xf]
        %v412 = vld [vmem:[#allocation6 + $0x3c] sm:$0xf]
        %v445 = vunpack.c.l.b16 %v365
        %v446 = vunpack.c.l.b16 %v366
        %v447 = vunpack.c.l.b16 %v367
        %v448 = vunpack.c.l.b16 %v368
        %v449 = vunpack.c.l.b16 %v369
        %v450 = vunpack.c.l.b16 %v370
        %v451 = vunpack.c.l.b16 %v371
        %v452 = vunpack.c.l.b16 %v372
        %v453 = vunpack.c.l.b16 %v373
        %v454 = vunpack.c.l.b16 %v374
        %v455 = vunpack.c.l.b16 %v375
        %v456 = vunpack.c.l.b16 %v376
        %v457 = vunpack.c.l.b16 %v377
        %v458 = vunpack.c.l.b16 %v378
        %v459 = vunpack.c.l.b16 %v379
        %v460 = vunpack.c.l.b16 %v380
        %v461 = vunpack.c.l.b16 %v381
        %v462 = vunpack.c.l.b16 %v382
        %v463 = vunpack.c.l.b16 %v383
        %v464 = vunpack.c.l.b16 %v384
        %v465 = vunpack.c.l.b16 %v385
        %v466 = vunpack.c.l.b16 %v386
        %v467 = vunpack.c.l.b16 %v387
        %v468 = vunpack.c.l.b16 %v388
        %v469 = vunpack.c.l.b16 %v389
        %v470 = vunpack.c.l.b16 %v390
        %v471 = vunpack.c.l.b16 %v391
        %v472 = vunpack.c.l.b16 %v392
        %v473 = vunpack.c.l.b16 %v393
        %v474 = vunpack.c.l.b16 %v394
        %v475 = vunpack.c.l.b16 %v395
        %v476 = vunpack.c.l.b16 %v396
        %v477 = vpack.c.b16 %v446, %v445
        %v478 = vpack.c.b16 %v448, %v447
        %v479 = vpack.c.b16 %v450, %v449
        %v480 = vpack.c.b16 %v452, %v451
        %v481 = vpack.c.b16 %v454, %v453
        %v482 = vpack.c.b16 %v456, %v455
        %v483 = vpack.c.b16 %v458, %v457
        %v484 = vpack.c.b16 %v460, %v459
        %v485 = vpack.c.b16 %v462, %v461
        %v486 = vpack.c.b16 %v464, %v463
        %v487 = vpack.c.b16 %v466, %v465
        %v488 = vpack.c.b16 %v468, %v467
        %v489 = vpack.c.b16 %v470, %v469
        %v490 = vpack.c.b16 %v472, %v471
        %v491 = vpack.c.b16 %v474, %v473
        %v492 = vpack.c.b16 %v476, %v475
        %v525 = vunpack.c.l.b16 %v397
        %v526 = vunpack.c.l.b16 %v398
        %v527 = vunpack.c.l.b16 %v399
        %v528 = vunpack.c.l.b16 %v400
        %v529 = vunpack.c.l.b16 %v401
        %v530 = vunpack.c.l.b16 %v402
        %v531 = vunpack.c.l.b16 %v403
        %v532 = vunpack.c.l.b16 %v404
        %v533 = vunpack.c.l.b16 %v405
        %v534 = vunpack.c.l.b16 %v406
        %v535 = vunpack.c.l.b16 %v407
        %v536 = vunpack.c.l.b16 %v408
        %v537 = vunpack.c.l.b16 %v409
        %v538 = vunpack.c.l.b16 %v410
        %v539 = vunpack.c.l.b16 %v411
        %v540 = vunpack.c.l.b16 %v412
        %v541 = vpack.c.b16 %v526, %v525
        %v542 = vpack.c.b16 %v528, %v527
        %v543 = vpack.c.b16 %v530, %v529
        %v544 = vpack.c.b16 %v532, %v531
        %v545 = vpack.c.b16 %v534, %v533
        %v546 = vpack.c.b16 %v536, %v535
        %v547 = vpack.c.b16 %v538, %v537
        %v548 = vpack.c.b16 %v540, %v539
        %557 = vmatprep.subr.bf16.mxu0 0
        %558 = vmatpush1.bf16.msra.mxu0 %v541
        %559 = vmatprep.subr.bf16.mxu0 0
        %560 = vmatpush1.bf16.msra.mxu0 %v542
        %561 = vmatprep.subr.bf16.mxu0 0
        %562 = vmatpush1.bf16.msra.mxu0 %v543
        %563 = vmatprep.subr.bf16.mxu0 0
        %564 = vmatpush1.bf16.msra.mxu0 %v544
        %565 = vmatprep.subr.bf16.mxu0 0
        %566 = vmatpush1.bf16.msra.mxu0 %v545
        %567 = vmatprep.subr.bf16.mxu0 0
        %568 = vmatpush1.bf16.msra.mxu0 %v546
        %569 = vmatprep.subr.bf16.mxu0 0
        %570 = vmatpush1.bf16.msra.mxu0 %v547
        %571 = vmatprep.subr.bf16.mxu0 0
        %572 = vmatpush1.bf16.msra.mxu0 %v548
        %573 = vmatprep.subr.bf16.mxu0 0
        %574 = vmatpush1.bf16.msra.mxu0 0
        %575 = vmatprep.subr.bf16.mxu0 0
        %576 = vmatpush1.bf16.msra.mxu0 0
        %577 = vmatprep.subr.bf16.mxu0 0
        %578 = vmatpush1.bf16.msra.mxu0 0
        %579 = vmatprep.subr.bf16.mxu0 0
        %580 = vmatpush1.bf16.msra.mxu0 0
        %581 = vmatprep.subr.bf16.mxu0 0
        %582 = vmatpush1.bf16.msra.mxu0 0
        %583 = vmatprep.subr.bf16.mxu0 0
        %584 = vmatpush1.bf16.msra.mxu0 0
        %585 = vmatprep.subr.bf16.mxu0 0
        %586 = vmatpush1.bf16.msra.mxu0 0
        %587 = vmatprep.subr.bf16.mxu0 0
        %588 = vmatpush1.bf16.msra.mxu0 0
        %589 = vmatprep.mubr.bf16.mxu0 0
        %590 = vmatmul.mubr.bf16.gmra.mrb[0].mxu0 %v477
        %v591 = vpop.f32.mrb[0].mxu0
        %v592 = vadd.f32 0.0, %v591
        %v593 = vpop.f32.mrb[0].mxu0
        %v594 = vpop.f32.mrb[0].mxu0
        %v595 = vadd.f32 0.0, %v594
        %v596 = vpop.f32.mrb[0].mxu0
        %597 = vmatprep.mubr.bf16.mxu0 0
        %598 = vmatmul.mubr.bf16.gmra.mrb[0].mxu0 %v478
        %v599 = vpop.f32.mrb[0].mxu0
        %v600 = vadd.f32 0.0, %v599
        %v601 = vpop.f32.mrb[0].mxu0
        %v602 = vpop.f32.mrb[0].mxu0
        %v603 = vadd.f32 0.0, %v602
        %v604 = vpop.f32.mrb[0].mxu0
        %605 = vmatprep.mubr.bf16.mxu0 0
        %606 = vmatmul.mubr.bf16.gmra.mrb[0].mxu0 %v479
        %v607 = vpop.f32.mrb[0].mxu0
        %v608 = vadd.f32 0.0, %v607
        %v609 = vpop.f32.mrb[0].mxu0
        %v610 = vpop.f32.mrb[0].mxu0
        %v611 = vadd.f32 0.0, %v610
        %v612 = vpop.f32.mrb[0].mxu0
        %613 = vmatprep.mubr.bf16.mxu0 0
        %614 = vmatmul.mubr.bf16.gmra.mrb[0].mxu0 %v480
        %v615 = vpop.f32.mrb[0].mxu0
        %v616 = vadd.f32 0.0, %v615
        %v617 = vpop.f32.mrb[0].mxu0
        %v618 = vpop.f32.mrb[0].mxu0
        %v619 = vadd.f32 0.0, %v618
        %v620 = vpop.f32.mrb[0].mxu0
        %621 = vmatprep.mubr.bf16.mxu0 0
        %622 = vmatmul.mubr.bf16.gmra.mrb[0].mxu0 %v481
        %v623 = vpop.f32.mrb[0].mxu0
        %v624 = vadd.f32 0.0, %v623
        %v625 = vpop.f32.mrb[0].mxu0
        %v626 = vpop.f32.mrb[0].mxu0
        %v627 = vadd.f32 0.0, %v626
        %v628 = vpop.f32.mrb[0].mxu0
        %629 = vmatprep.mubr.bf16.mxu0 0
        %630 = vmatmul.mubr.bf16.gmra.mrb[0].mxu0 %v482
        %v631 = vpop.f32.mrb[0].mxu0
        %v632 = vadd.f32 0.0, %v631
        %v633 = vpop.f32.mrb[0].mxu0
        %v634 = vpop.f32.mrb[0].mxu0
        %v635 = vadd.f32 0.0, %v634
        %v636 = vpop.f32.mrb[0].mxu0
        %637 = vmatprep.mubr.bf16.mxu0 0
        %638 = vmatmul.mubr.bf16.gmra.mrb[0].mxu0 %v483
        %v639 = vpop.f32.mrb[0].mxu0
        %v640 = vadd.f32 0.0, %v639
        %v641 = vpop.f32.mrb[0].mxu0
        %v642 = vpop.f32.mrb[0].mxu0
        %v643 = vadd.f32 0.0, %v642
        %v644 = vpop.f32.mrb[0].mxu0
        %645 = vmatprep.mubr.bf16.mxu0 0
        %646 = vmatmul.mubr.bf16.gmra.mrb[0].mxu0 %v484
        %v647 = vpop.f32.mrb[0].mxu0
        %v648 = vadd.f32 0.0, %v647
        %v649 = vpop.f32.mrb[0].mxu0
        %v650 = vpop.f32.mrb[0].mxu0
        %v651 = vadd.f32 0.0, %v650
        %v652 = vpop.f32.mrb[0].mxu0
        %653 = vmatprep.mubr.bf16.mxu0 0
        %654 = vmatmul.mubr.bf16.gmra.mrb[0].mxu0 %v485
        %v655 = vpop.f32.mrb[0].mxu0
        %v656 = vadd.f32 0.0, %v655
        %v657 = vpop.f32.mrb[0].mxu0
        %v658 = vpop.f32.mrb[0].mxu0
        %v659 = vadd.f32 0.0, %v658
        %v660 = vpop.f32.mrb[0].mxu0
        %661 = vmatprep.mubr.bf16.mxu0 0
        %662 = vmatmul.mubr.bf16.gmra.mrb[0].mxu0 %v486
        %v663 = vpop.f32.mrb[0].mxu0
        %v664 = vadd.f32 0.0, %v663
        %v665 = vpop.f32.mrb[0].mxu0
        %v666 = vpop.f32.mrb[0].mxu0
        %v667 = vadd.f32 0.0, %v666
        %v668 = vpop.f32.mrb[0].mxu0
        %669 = vmatprep.mubr.bf16.mxu0 0
        %670 = vmatmul.mubr.bf16.gmra.mrb[0].mxu0 %v487
        %v671 = vpop.f32.mrb[0].mxu0
        %v672 = vadd.f32 0.0, %v671
        %v673 = vpop.f32.mrb[0].mxu0
        %v674 = vpop.f32.mrb[0].mxu0
        %v675 = vadd.f32 0.0, %v674
        %v676 = vpop.f32.mrb[0].mxu0
        %677 = vmatprep.mubr.bf16.mxu0 0
        %678 = vmatmul.mubr.bf16.gmra.mrb[0].mxu0 %v488
        %v679 = vpop.f32.mrb[0].mxu0
        %v680 = vadd.f32 0.0, %v679
        %v681 = vpop.f32.mrb[0].mxu0
        %v682 = vpop.f32.mrb[0].mxu0
        %v683 = vadd.f32 0.0, %v682
        %v684 = vpop.f32.mrb[0].mxu0
        %685 = vmatprep.mubr.bf16.mxu0 0
        %686 = vmatmul.mubr.bf16.gmra.mrb[0].mxu0 %v489
        %v687 = vpop.f32.mrb[0].mxu0
        %v688 = vadd.f32 0.0, %v687
        %v689 = vpop.f32.mrb[0].mxu0
        %v690 = vpop.f32.mrb[0].mxu0
        %v691 = vadd.f32 0.0, %v690
        %v692 = vpop.f32.mrb[0].mxu0
        %693 = vmatprep.mubr.bf16.mxu0 0
        %694 = vmatmul.mubr.bf16.gmra.mrb[0].mxu0 %v490
        %v695 = vpop.f32.mrb[0].mxu0
        %v696 = vadd.f32 0.0, %v695
        %v697 = vpop.f32.mrb[0].mxu0
        %v698 = vpop.f32.mrb[0].mxu0
        %v699 = vadd.f32 0.0, %v698
        %v700 = vpop.f32.mrb[0].mxu0
        %701 = vmatprep.mubr.bf16.mxu0 0
        %702 = vmatmul.mubr.bf16.gmra.mrb[0].mxu0 %v491
        %v703 = vpop.f32.mrb[0].mxu0
        %v704 = vadd.f32 0.0, %v703
        %v705 = vpop.f32.mrb[0].mxu0
        %v706 = vpop.f32.mrb[0].mxu0
        %v707 = vadd.f32 0.0, %v706
        %v708 = vpop.f32.mrb[0].mxu0
        %709 = vmatprep.mubr.bf16.mxu0 0
        %710 = vmatmul.mubr.bf16.gmra.mrb[0].mxu0 %v492
        %v711 = vpop.f32.mrb[0].mxu0
        %v712 = vadd.f32 0.0, %v711
        %v713 = vpop.f32.mrb[0].mxu0
        %v714 = vpop.f32.mrb[0].mxu0
        %v715 = vadd.f32 0.0, %v714
        %v716 = vpop.f32.mrb[0].mxu0
        %717 = vdwg.mxu0
        %v718 = vadd.f32 %v333, %v592
        %v719 = vadd.f32 %v334, %v595
        %v720 = vadd.f32 %v335, %v600
        %v721 = vadd.f32 %v336, %v603
        %v722 = vadd.f32 %v337, %v608
        %v723 = vadd.f32 %v338, %v611
        %v724 = vadd.f32 %v339, %v616
        %v725 = vadd.f32 %v340, %v619
        %v726 = vadd.f32 %v341, %v624
        %v727 = vadd.f32 %v342, %v627
        %v728 = vadd.f32 %v343, %v632
        %v729 = vadd.f32 %v344, %v635
        %v730 = vadd.f32 %v345, %v640
        %v731 = vadd.f32 %v346, %v643
        %v732 = vadd.f32 %v347, %v648
        %v733 = vadd.f32 %v348, %v651
        %v734 = vadd.f32 %v349, %v656
        %v735 = vadd.f32 %v350, %v659
        %v736 = vadd.f32 %v351, %v664
        %v737 = vadd.f32 %v352, %v667
        %v738 = vadd.f32 %v353, %v672
        %v739 = vadd.f32 %v354, %v675
        %v740 = vadd.f32 %v355, %v680
        %v741 = vadd.f32 %v356, %v683
        %v742 = vadd.f32 %v357, %v688
        %v743 = vadd.f32 %v358, %v691
        %v744 = vadd.f32 %v359, %v696
        %v745 = vadd.f32 %v360, %v699
        %v746 = vadd.f32 %v361, %v704
        %v747 = vadd.f32 %v362, %v707
        %v748 = vadd.f32 %v363, %v712
        %v749 = vadd.f32 %v364, %v715
        %750 = vst [vmem:[#allocation2] sm:$0xff] %v718
        %751 = vst [vmem:[#allocation2 + $0x8] sm:$0xff] %v719
        %752 = vst [vmem:[#allocation2 + $0x10] sm:$0xff] %v720
        %753 = vst [vmem:[#allocation2 + $0x18] sm:$0xff] %v721
        %754 = vst [vmem:[#allocation2 + $0x20] sm:$0xff] %v722
        %755 = vst [vmem:[#allocation2 + $0x28] sm:$0xff] %v723
        %756 = vst [vmem:[#allocation2 + $0x30] sm:$0xff] %v724
        %757 = vst [vmem:[#allocation2 + $0x38] sm:$0xff] %v725
        %758 = vst [vmem:[#allocation2 + $0x40] sm:$0xff] %v726
        %759 = vst [vmem:[#allocation2 + $0x48] sm:$0xff] %v727
        %760 = vst [vmem:[#allocation2 + $0x50] sm:$0xff] %v728
        %761 = vst [vmem:[#allocation2 + $0x58] sm:$0xff] %v729
        %762 = vst [vmem:[#allocation2 + $0x60] sm:$0xff] %v730
        %763 = vst [vmem:[#allocation2 + $0x68] sm:$0xff] %v731
        %764 = vst [vmem:[#allocation2 + $0x70] sm:$0xff] %v732
        %765 = vst [vmem:[#allocation2 + $0x78] sm:$0xff] %v733
        %766 = vst [vmem:[#allocation2 + $0x80] sm:$0xff] %v734
        %767 = vst [vmem:[#allocation2 + $0x88] sm:$0xff] %v735
        %768 = vst [vmem:[#allocation2 + $0x90] sm:$0xff] %v736
        %769 = vst [vmem:[#allocation2 + $0x98] sm:$0xff] %v737
        %770 = vst [vmem:[#allocation2 + $0xa0] sm:$0xff] %v738
        %771 = vst [vmem:[#allocation2 + $0xa8] sm:$0xff] %v739
        %772 = vst [vmem:[#allocation2 + $0xb0] sm:$0xff] %v740
        %773 = vst [vmem:[#allocation2 + $0xb8] sm:$0xff] %v741
        %774 = vst [vmem:[#allocation2 + $0xc0] sm:$0xff] %v742
        %775 = vst [vmem:[#allocation2 + $0xc8] sm:$0xff] %v743
        %776 = vst [vmem:[#allocation2 + $0xd0] sm:$0xff] %v744
        %777 = vst [vmem:[#allocation2 + $0xd8] sm:$0xff] %v745
        %778 = vst [vmem:[#allocation2 + $0xe0] sm:$0xff] %v746
        %779 = vst [vmem:[#allocation2 + $0xe8] sm:$0xff] %v747
        %780 = vst [vmem:[#allocation2 + $0xf0] sm:$0xff] %v748
        %781 = vst [vmem:[#allocation2 + $0xf8] sm:$0xff] %v749
        // Predicated region
        $region45: #{tpu_custom_call.1} parent=27 // pred_check
          %p782 = pneg %p291
        $region46: #{tpu_custom_call.1} parent=27 // pred_check_branch
          %784 = sbr.rel (%p782) target = $region48
        $region47: #{tpu_custom_call.1} parent=27 // pred_region
          %v785 = vld [vmem:[#allocation2] sm:$0xff]
          %v786 = vld [vmem:[#allocation2 + $0x8] sm:$0xff]
          %v787 = vld [vmem:[#allocation2 + $0x10] sm:$0xff]
          %v788 = vld [vmem:[#allocation2 + $0x18] sm:$0xff]
          %v789 = vld [vmem:[#allocation2 + $0x20] sm:$0xff]
          %v790 = vld [vmem:[#allocation2 + $0x28] sm:$0xff]
          %v791 = vld [vmem:[#allocation2 + $0x30] sm:$0xff]
          %v792 = vld [vmem:[#allocation2 + $0x38] sm:$0xff]
          %v793 = vld [vmem:[#allocation2 + $0x40] sm:$0xff]
          %v794 = vld [vmem:[#allocation2 + $0x48] sm:$0xff]
          %v795 = vld [vmem:[#allocation2 + $0x50] sm:$0xff]
          %v796 = vld [vmem:[#allocation2 + $0x58] sm:$0xff]
          %v797 = vld [vmem:[#allocation2 + $0x60] sm:$0xff]
          %v798 = vld [vmem:[#allocation2 + $0x68] sm:$0xff]
          %v799 = vld [vmem:[#allocation2 + $0x70] sm:$0xff]
          %v800 = vld [vmem:[#allocation2 + $0x78] sm:$0xff]
          %v801 = vld [vmem:[#allocation2 + $0x80] sm:$0xff]
          %v802 = vld [vmem:[#allocation2 + $0x88] sm:$0xff]
          %v803 = vld [vmem:[#allocation2 + $0x90] sm:$0xff]
          %v804 = vld [vmem:[#allocation2 + $0x98] sm:$0xff]
          %v805 = vld [vmem:[#allocation2 + $0xa0] sm:$0xff]
          %v806 = vld [vmem:[#allocation2 + $0xa8] sm:$0xff]
          %v807 = vld [vmem:[#allocation2 + $0xb0] sm:$0xff]
          %v808 = vld [vmem:[#allocation2 + $0xb8] sm:$0xff]
          %v809 = vld [vmem:[#allocation2 + $0xc0] sm:$0xff]
          %v810 = vld [vmem:[#allocation2 + $0xc8] sm:$0xff]
          %v811 = vld [vmem:[#allocation2 + $0xd0] sm:$0xff]
          %v812 = vld [vmem:[#allocation2 + $0xd8] sm:$0xff]
          %v813 = vld [vmem:[#allocation2 + $0xe0] sm:$0xff]
          %v814 = vld [vmem:[#allocation2 + $0xe8] sm:$0xff]
          %v815 = vld [vmem:[#allocation2 + $0xf0] sm:$0xff]
          %v816 = vld [vmem:[#allocation2 + $0xf8] sm:$0xff]
          %v817 = vpack.c.bf16 %v786, %v785
          %v818 = vpack.c.bf16 %v788, %v787
          %v819 = vpack.c.bf16 %v790, %v789
          %v820 = vpack.c.bf16 %v792, %v791
          %v821 = vpack.c.bf16 %v794, %v793
          %v822 = vpack.c.bf16 %v796, %v795
          %v823 = vpack.c.bf16 %v798, %v797
          %v824 = vpack.c.bf16 %v800, %v799
          %v825 = vpack.c.bf16 %v802, %v801
          %v826 = vpack.c.bf16 %v804, %v803
          %v827 = vpack.c.bf16 %v806, %v805
          %v828 = vpack.c.bf16 %v808, %v807
          %v829 = vpack.c.bf16 %v810, %v809
          %v830 = vpack.c.bf16 %v812, %v811
          %v831 = vpack.c.bf16 %v814, %v813
          %v832 = vpack.c.bf16 %v816, %v815
          %v849 = vunpack.c.l.b16 %v817
          %v850 = vunpack.c.h.b16 %v817
          %v851 = vunpack.c.l.b16 %v818
          %v852 = vunpack.c.h.b16 %v818
          %v853 = vunpack.c.l.b16 %v819
          %v854 = vunpack.c.h.b16 %v819
          %v855 = vunpack.c.l.b16 %v820
          %v856 = vunpack.c.h.b16 %v820
          %v857 = vunpack.c.l.b16 %v821
          %v858 = vunpack.c.h.b16 %v821
          %v859 = vunpack.c.l.b16 %v822
          %v860 = vunpack.c.h.b16 %v822
          %v861 = vunpack.c.l.b16 %v823
          %v862 = vunpack.c.h.b16 %v823
          %v863 = vunpack.c.l.b16 %v824
          %v864 = vunpack.c.h.b16 %v824
          %v865 = vunpack.c.l.b16 %v825
          %v866 = vunpack.c.h.b16 %v825
          %v867 = vunpack.c.l.b16 %v826
          %v868 = vunpack.c.h.b16 %v826
          %v869 = vunpack.c.l.b16 %v827
          %v870 = vunpack.c.h.b16 %v827
          %v871 = vunpack.c.l.b16 %v828
          %v872 = vunpack.c.h.b16 %v828
          %v873 = vunpack.c.l.b16 %v829
          %v874 = vunpack.c.h.b16 %v829
          %v875 = vunpack.c.l.b16 %v830
          %v876 = vunpack.c.h.b16 %v830
          %v877 = vunpack.c.l.b16 %v831
          %v878 = vunpack.c.h.b16 %v831
          %v879 = vunpack.c.l.b16 %v832
          %v880 = vunpack.c.h.b16 %v832
          %v881 = vpack.c.b16 %v849, %v849
          %v882 = vpack.c.b16 %v850, %v850
          %v883 = vpack.c.b16 %v851, %v851
          %v884 = vpack.c.b16 %v852, %v852
          %v885 = vpack.c.b16 %v853, %v853
          %v886 = vpack.c.b16 %v854, %v854
          %v887 = vpack.c.b16 %v855, %v855
          %v888 = vpack.c.b16 %v856, %v856
          %v889 = vpack.c.b16 %v857, %v857
          %v890 = vpack.c.b16 %v858, %v858
          %v891 = vpack.c.b16 %v859, %v859
          %v892 = vpack.c.b16 %v860, %v860
          %v893 = vpack.c.b16 %v861, %v861
          %v894 = vpack.c.b16 %v862, %v862
          %v895 = vpack.c.b16 %v863, %v863
          %v896 = vpack.c.b16 %v864, %v864
          %v897 = vpack.c.b16 %v865, %v865
          %v898 = vpack.c.b16 %v866, %v866
          %v899 = vpack.c.b16 %v867, %v867
          %v900 = vpack.c.b16 %v868, %v868
          %v901 = vpack.c.b16 %v869, %v869
          %v902 = vpack.c.b16 %v870, %v870
          %v903 = vpack.c.b16 %v871, %v871
          %v904 = vpack.c.b16 %v872, %v872
          %v905 = vpack.c.b16 %v873, %v873
          %v906 = vpack.c.b16 %v874, %v874
          %v907 = vpack.c.b16 %v875, %v875
          %v908 = vpack.c.b16 %v876, %v876
          %v909 = vpack.c.b16 %v877, %v877
          %v910 = vpack.c.b16 %v878, %v878
          %v911 = vpack.c.b16 %v879, %v879
          %v912 = vpack.c.b16 %v880, %v880
          %945 = vst [vmem:[%s269] sm:$0xf] %v881
          %946 = vst [vmem:[%s269 + $0x4] sm:$0xf] %v882
          %947 = vst [vmem:[%s269 + $0x8] sm:$0xf] %v883
          %948 = vst [vmem:[%s269 + $0xc] sm:$0xf] %v884
          %949 = vst [vmem:[%s269 + $0x10] sm:$0xf] %v885
          %950 = vst [vmem:[%s269 + $0x14] sm:$0xf] %v886
          %951 = vst [vmem:[%s269 + $0x18] sm:$0xf] %v887
          %952 = vst [vmem:[%s269 + $0x1c] sm:$0xf] %v888
          %953 = vst [vmem:[%s269 + $0x20] sm:$0xf] %v889
          %954 = vst [vmem:[%s269 + $0x24] sm:$0xf] %v890
          %955 = vst [vmem:[%s269 + $0x28] sm:$0xf] %v891
          %956 = vst [vmem:[%s269 + $0x2c] sm:$0xf] %v892
          %957 = vst [vmem:[%s269 + $0x30] sm:$0xf] %v893
          %958 = vst [vmem:[%s269 + $0x34] sm:$0xf] %v894
          %959 = vst [vmem:[%s269 + $0x38] sm:$0xf] %v895
          %960 = vst [vmem:[%s269 + $0x3c] sm:$0xf] %v896
          %961 = vst [vmem:[%s269 + $0x40] sm:$0xf] %v897
          %962 = vst [vmem:[%s269 + $0x44] sm:$0xf] %v898
          %963 = vst [vmem:[%s269 + $0x48] sm:$0xf] %v899
          %964 = vst [vmem:[%s269 + $0x4c] sm:$0xf] %v900
          %965 = vst [vmem:[%s269 + $0x50] sm:$0xf] %v901
          %966 = vst [vmem:[%s269 + $0x54] sm:$0xf] %v902
          %967 = vst [vmem:[%s269 + $0x58] sm:$0xf] %v903
          %968 = vst [vmem:[%s269 + $0x5c] sm:$0xf] %v904
          %969 = vst [vmem:[%s269 + $0x60] sm:$0xf] %v905
          %970 = vst [vmem:[%s269 + $0x64] sm:$0xf] %v906
          %971 = vst [vmem:[%s269 + $0x68] sm:$0xf] %v907
          %972 = vst [vmem:[%s269 + $0x6c] sm:$0xf] %v908
          %973 = vst [vmem:[%s269 + $0x70] sm:$0xf] %v909
          %974 = vst [vmem:[%s269 + $0x74] sm:$0xf] %v910
          %975 = vst [vmem:[%s269 + $0x78] sm:$0xf] %v911
          %976 = vst [vmem:[%s269 + $0x7c] sm:$0xf] %v912
          %v977 = vld [vmem:[%s276] sm:$0xff]
          %v978 = vadd.f32 %v785, %v786
          %v979 = vadd.f32 %v978, %v787
          %v980 = vadd.f32 %v979, %v788
          %v981 = vadd.f32 %v980, %v789
          %v982 = vadd.f32 %v981, %v790
          %v983 = vadd.f32 %v982, %v791
          %v984 = vadd.f32 %v983, %v792
          %v985 = vadd.f32 %v984, %v793
          %v986 = vadd.f32 %v985, %v794
          %v987 = vadd.f32 %v986, %v795
          %v988 = vadd.f32 %v987, %v796
          %v989 = vadd.f32 %v988, %v797
          %v990 = vadd.f32 %v989, %v798
          %v991 = vadd.f32 %v990, %v799
          %v992 = vadd.f32 %v991, %v800
          %v993 = vadd.f32 %v992, %v801
          %v994 = vadd.f32 %v993, %v802
          %v995 = vadd.f32 %v994, %v803
          %v996 = vadd.f32 %v995, %v804
          %v997 = vadd.f32 %v996, %v805
          %v998 = vadd.f32 %v997, %v806
          %v999 = vadd.f32 %v998, %v807
          %v1000 = vadd.f32 %v999, %v808
          %v1001 = vadd.f32 %v1000, %v809
          %v1002 = vadd.f32 %v1001, %v810
          %v1003 = vadd.f32 %v1002, %v811
          %v1004 = vadd.f32 %v1003, %v812
          %v1005 = vadd.f32 %v1004, %v813
          %v1006 = vadd.f32 %v1005, %v814
          %v1007 = vadd.f32 %v1006, %v815
          %v1008 = vadd.f32 %v1007, %v816
          %v1009 = vadd.f32 %v977, %v1008
          %1010 = vst [vmem:[%s276] sm:$0xff] %v1009
          %v1011 = vld [vmem:[%s283] sm:$0xff]
          %v1012 = vmul.f32 %v785, %v785
          %v1013 = vmul.f32 %v786, %v786
          %v1014 = vmul.f32 %v787, %v787
          %v1015 = vmul.f32 %v788, %v788
          %v1016 = vmul.f32 %v789, %v789
          %v1017 = vmul.f32 %v790, %v790
          %v1018 = vmul.f32 %v791, %v791
          %v1019 = vmul.f32 %v792, %v792
          %v1020 = vmul.f32 %v793, %v793
          %v1021 = vmul.f32 %v794, %v794
          %v1022 = vmul.f32 %v795, %v795
          %v1023 = vmul.f32 %v796, %v796
          %v1024 = vmul.f32 %v797, %v797
          %v1025 = vmul.f32 %v798, %v798
          %v1026 = vmul.f32 %v799, %v799
          %v1027 = vmul.f32 %v800, %v800
          %v1028 = vmul.f32 %v801, %v801
          %v1029 = vmul.f32 %v802, %v802
          %v1030 = vmul.f32 %v803, %v803
          %v1031 = vmul.f32 %v804, %v804
          %v1032 = vmul.f32 %v805, %v805
          %v1033 = vmul.f32 %v806, %v806
          %v1034 = vmul.f32 %v807, %v807
          %v1035 = vmul.f32 %v808, %v808
          %v1036 = vmul.f32 %v809, %v809
          %v1037 = vmul.f32 %v810, %v810
          %v1038 = vmul.f32 %v811, %v811
          %v1039 = vmul.f32 %v812, %v812
          %v1040 = vmul.f32 %v813, %v813
          %v1041 = vmul.f32 %v814, %v814
          %v1042 = vmul.f32 %v815, %v815
          %v1043 = vmul.f32 %v816, %v816
          %v1044 = vadd.f32 %v1012, %v1013
          %v1045 = vadd.f32 %v1044, %v1014
          %v1046 = vadd.f32 %v1045, %v1015
          %v1047 = vadd.f32 %v1046, %v1016
          %v1048 = vadd.f32 %v1047, %v1017
          %v1049 = vadd.f32 %v1048, %v1018
          %v1050 = vadd.f32 %v1049, %v1019
          %v1051 = vadd.f32 %v1050, %v1020
          %v1052 = vadd.f32 %v1051, %v1021
          %v1053 = vadd.f32 %v1052, %v1022
          %v1054 = vadd.f32 %v1053, %v1023
          %v1055 = vadd.f32 %v1054, %v1024
          %v1056 = vadd.f32 %v1055, %v1025
          %v1057 = vadd.f32 %v1056, %v1026
          %v1058 = vadd.f32 %v1057, %v1027
          %v1059 = vadd.f32 %v1058, %v1028
          %v1060 = vadd.f32 %v1059, %v1029
          %v1061 = vadd.f32 %v1060, %v1030
          %v1062 = vadd.f32 %v1061, %v1031
          %v1063 = vadd.f32 %v1062, %v1032
          %v1064 = vadd.f32 %v1063, %v1033
          %v1065 = vadd.f32 %v1064, %v1034
          %v1066 = vadd.f32 %v1065, %v1035
          %v1067 = vadd.f32 %v1066, %v1036
          %v1068 = vadd.f32 %v1067, %v1037
          %v1069 = vadd.f32 %v1068, %v1038
          %v1070 = vadd.f32 %v1069, %v1039
          %v1071 = vadd.f32 %v1070, %v1040
          %v1072 = vadd.f32 %v1071, %v1041
          %v1073 = vadd.f32 %v1072, %v1042
          %v1074 = vadd.f32 %v1073, %v1043
          %v1075 = vadd.f32 %v1011, %v1074
          %1076 = vst [vmem:[%s283] sm:$0xff] %v1075
        $region48: #{tpu_custom_call.1} parent=27 // pred_fallthru
          _
        %s1077 = sand.u32 %s111, 1
        %s1078 = scalar_lea.sflag [#allocation5], %s1077
        %s1079 = sand.u32 %s111, 1
        %s1080 = smul.addr %s1079, 128
        %s1081 = scalar_lea.vmem [#allocation8], %s1080
        %s1082 = sand.u32 %s26, 1
        %s1083 = scalar_lea.sflag [#allocation10], %s1082
        %s1084 = sand.u32 %s137, 1
        %s1085 = smul.addr %s1084, 8
        %s1086 = scalar_lea.vmem [#allocation9], %s1085
        %s1087 = sand.u32 %s26, 1
        %s1088 = scalar_lea.sflag [#allocation10], %s1087
        %s1089 = sand.u32 %s163, 1
        %s1090 = smul.addr %s1089, 8
        %s1091 = scalar_lea.vmem [#allocation11], %s1090
        // Predicated region
        $region49: #{tpu_custom_call.1} parent=27 // pred_check
          %p1092 = pneg %p121
        $region50: #{tpu_custom_call.1} parent=27 // pred_check_branch
          %1094 = sbr.rel (%p1092) target = $region52
        $region51: #{tpu_custom_call.1} parent=27 // pred_region
          %s1095 = sadd.s32 %s31, %s32
          %s1096 = smul.u32 32, %s1095
          %s1098 = ssub.s32 2048, 2048
          %1099 = vsyncadd %s1078, %s1098
          %s1100 = smul.addr %s1096, 64
          %s1101 = scalar_lea.hbm %s2, %s1100
          %s1102 = sshll.u32 %s1081, 4
          %s1103 = int_to_ptr.vmem [resolvable:$true] %s1102
          %1108 = dma.vmem_to_hbm [thread:$0]  %s1103, 2048, %s1101, %s1078, 64, 64, 4
        $region52: #{tpu_custom_call.1} parent=27 // pred_fallthru
          _
        // Predicated region
        $region53: #{tpu_custom_call.1} parent=27 // pred_check
          %p1109 = pneg %p147
        $region54: #{tpu_custom_call.1} parent=27 // pred_check_branch
          %1111 = sbr.rel (%p1109) target = $region56
        $region55: #{tpu_custom_call.1} parent=27 // pred_region
          %s1113 = ssub.s32 128, 128
          %1114 = vsyncadd %s1083, %s1113
          %s1115 = smul.addr %s31, 128
          %s1116 = scalar_lea.hbm %s3, %s1115
          %s1118 = sshll.u32 %s1086, 4
          %s1119 = int_to_ptr.vmem [resolvable:$true] %s1118
          %1121 = dma.vmem_to_hbm [thread:$0]  %s1119, 128, %s1116, %s1083
        $region56: #{tpu_custom_call.1} parent=27 // pred_fallthru
          _
        // Predicated region
        $region57: #{tpu_custom_call.1} parent=27 // pred_check
          %p1122 = pneg %p173
        $region58: #{tpu_custom_call.1} parent=27 // pred_check_branch
          %1124 = sbr.rel (%p1122) target = $region60
        $region59: #{tpu_custom_call.1} parent=27 // pred_region
          %s1126 = ssub.s32 128, 128
          %1127 = vsyncadd %s1088, %s1126
          %s1128 = smul.addr %s31, 128
          %s1129 = scalar_lea.hbm %s4, %s1128
          %s1131 = sshll.u32 %s1091, 4
          %s1132 = int_to_ptr.vmem [resolvable:$true] %s1131
          %1134 = dma.vmem_to_hbm [thread:$0]  %s1132, 128, %s1129, %s1088
        $region60: #{tpu_custom_call.1} parent=27 // pred_fallthru
          _
      $region28: #{tpu_custom_call.1} parent=5 // pred_fallthru
        _
      %p1135 = scmp.le.s32.totalorder 2, %s21
      // Predicated region
      $region61: #{tpu_custom_call.1} parent=5 // pred_check
        %p1136 = pneg %p1135
      $region62: #{tpu_custom_call.1} parent=5 // pred_check_branch
        %1138 = sbr.rel (%p1136) target = $region64
      $region63: #{tpu_custom_call.1} parent=5 // pred_region
        %s1139 = ssub.s32 %s21, 2
        // Predicated region
        $region65: #{tpu_custom_call.1} parent=63 // pred_check
          %p1140 = pneg %p127
        $region66: #{tpu_custom_call.1} parent=63 // pred_check_branch
          %1142 = sbr.rel (%p1140) target = $region68
        $region67: #{tpu_custom_call.1} parent=63 // pred_region
          %s1143 = sand.u32 %s112, 1
          %s1144 = scalar_lea.sflag [#allocation5], %s1143
          %s1145 = sand.u32 %s112, 1
          %s1146 = smul.addr %s1145, 128
          %s1147 = scalar_lea.vmem [#allocation8], %s1146
          %1148 = dma.done %s1144, 2048
        $region68: #{tpu_custom_call.1} parent=63 // pred_fallthru
          _
        // Predicated region
        $region69: #{tpu_custom_call.1} parent=63 // pred_check
          %p1149 = pneg %p153
        $region70: #{tpu_custom_call.1} parent=63 // pred_check_branch
          %1151 = sbr.rel (%p1149) target = $region72
        $region71: #{tpu_custom_call.1} parent=63 // pred_region
          %s1152 = sand.u32 %s27, 1
          %s1153 = scalar_lea.sflag [#allocation10], %s1152
          %s1154 = sand.u32 %s138, 1
          %s1155 = smul.addr %s1154, 8
          %s1156 = scalar_lea.vmem [#allocation9], %s1155
          %1157 = dma.done %s1153, 128
        $region72: #{tpu_custom_call.1} parent=63 // pred_fallthru
          _
        // Predicated region
        $region73: #{tpu_custom_call.1} parent=63 // pred_check
          %p1158 = pneg %p179
        $region74: #{tpu_custom_call.1} parent=63 // pred_check_branch
          %1160 = sbr.rel (%p1158) target = $region76
        $region75: #{tpu_custom_call.1} parent=63 // pred_region
          %s1161 = sand.u32 %s27, 1
          %s1162 = scalar_lea.sflag [#allocation10], %s1161
          %s1163 = sand.u32 %s164, 1
          %s1164 = smul.addr %s1163, 8
          %s1165 = scalar_lea.vmem [#allocation11], %s1164
          %1166 = dma.done %s1162, 128
        $region76: #{tpu_custom_call.1} parent=63 // pred_fallthru
          _
      $region64: #{tpu_custom_call.1} parent=5 // pred_fallthru
        _
    $region6: #{tpu_custom_call.1} parent=1 // loop_footer
      %s25 = sadd.s32 1, %s21
    $region7: #{tpu_custom_call.1} parent=1 // loop_footer_branch
      %20 = sbr.rel target = $region3
    $region8: #{tpu_custom_call.1} parent=1 // loop_exit
      _
    %1167 = vsyncpa [#allocation4], 1
    %s1168 = scalar_lea.sflag [#allocation4], 1
    %1169 = vsyncpa %s1168, 1
    %1170 = vsyncpa [#allocation7], 1
    %1171 = vsyncpa [#allocation5], 1
    %s1172 = scalar_lea.sflag [#allocation5], 1
    %1173 = vsyncpa %s1172, 1
    %1174 = vsyncpa [#allocation10], 1
    %s1175 = scalar_lea.sflag [#allocation10], 1
    %1176 = vsyncpa %s1175, 1

</llo_original>
